<compile_context>
chip_gen: v5e
topology: v5e:2x2
jax: 0.10.0
libtpu: 0.0.40
codegen_flags: <defaults>
</compile_context>

<pallas_src>
import functools

import jax
import jax.numpy as jnp
from jax.experimental import pallas as pl
from jax.experimental.pallas import tpu as pltpu


def _round_up(x: int, m: int) -> int:
    return ((x + m - 1) // m) * m


def _vmem_cap_bytes() -> int:
    """Per-core VMEM cap for this kernel, with compiler-internal headroom."""
    try:
        cap = int(pltpu.get_tpu_info().vmem_capacity_bytes)
    except Exception:
        return 48 << 20  # safe on v5e/v6e (128 MiB) and v7x (64 MiB)
    return max(cap - (16 << 20), 32 << 20)


def _resident_spec(block_shape, index_map):
    """BlockSpec for operands with a constant index_map (DMA'd once, resident).

    Request a single pipeline buffer so the large resident w2t is not
    double-buffered (the default 2 buffers would double its VMEM footprint).
    Falls back to the default spec if this jax version lacks pipeline_mode.
    """
    try:
        return pl.BlockSpec(block_shape, index_map, pipeline_mode=pl.Buffered(1))
    except Exception:  # older jax: no pipeline_mode / Buffered(1)
        return pl.BlockSpec(block_shape, index_map)


def timestep_embed_kernel(x_ref, w1t_ref, b1_ref, w2t_ref, b2_ref, o_ref, *, block_b):
    # x_ref:   (B_pad, 1)      f32, resident across the whole grid
    # w1t_ref: (1, E_pad)      f32  (transpose of Linear(1,E).weight, zero-padded)
    # b1_ref:  (1, E_pad)      f32
    # w2t_ref: (E_pad, E_pad)  bf16 (default) or f32 (strict-accuracy path)
    # b2_ref:  (1, E_pad)      f32
    # o_ref:   (block_b, E_pad) f32
    i = pl.program_id(0)
    row0 = pl.multiple_of(i * block_b, 8)            # sublane-aligned tile start
    x = x_ref[pl.ds(row0, block_b), :]               # (TB, 1)

    # linear1: out[b, e] = x[b, 0] * W1[e, 0] + b1[e].
    # K=1 matmul == broadcast multiply -> keep on the VPU, off the MXU. Stays f32
    # (v5e VPU/EUP have no native bf16; casting here would just add VALU traffic).
    h = x * w1t_ref[...] + b1_ref[...]               # (TB, E_pad) f32
    # SiLU: h * sigmoid(h)  (sigmoid goes to the EUP slot, essentially free)
    h = h * jax.nn.sigmoid(h)

    # linear2 on the MXU; padded rows/cols of w2t are zero so padding is inert.
    w2t = w2t_ref[...]
    if w2t.dtype == jnp.float32:
        # Strict-accuracy path: force full-f32 MXU passes. (Default precision may
        # silently truncate operands to bf16, so be explicit when f32 is required.)
        acc = jnp.dot(h, w2t, precision=jax.lax.Precision.HIGHEST,
                      preferred_element_type=jnp.float32)
    else:
        # Default path: bf16 MXU operands, f32 accumulation.
        acc = jnp.dot(h.astype(w2t.dtype), w2t, preferred_element_type=jnp.float32)

    o_ref[...] = acc + b2_ref[...]


def prepare_timestep_params(w1, b1, w2, b2, *, mxu_dtype=jnp.bfloat16):
    """Run ONCE at parameter-load time: transpose + zero-pad weights to lane-dense
    (multiple-of-128) layouts.  w2t is stored in `mxu_dtype` (bf16 default: MXU
    native, halves the dominant weight DMA and resident VMEM; pass jnp.float32
    for strict 1e-5 accuracy).  Returns ((w1t, b1, w2t, b2), embed_dim)."""
    E = int(w1.shape[0])
    E_pad = _round_up(E, 128)
    w1t = jnp.zeros((1, E_pad), jnp.float32).at[0, :E].set(
        w1[:, 0].astype(jnp.float32))
    b1p = jnp.zeros((1, E_pad), jnp.float32).at[0, :E].set(
        b1.astype(jnp.float32))
    w2t = (jnp.zeros((E_pad, E_pad), jnp.float32)
           .at[:E, :E].set(w2.T.astype(jnp.float32))
           .astype(mxu_dtype))
    b2p = jnp.zeros((1, E_pad), jnp.float32).at[0, :E].set(
        b2.astype(jnp.float32))
    return (w1t, b1p, w2t, b2p), E


@functools.partial(jax.jit, static_argnames=("embed_dim",))
def timestep_embedding(x, w1t, b1p, w2t, b2p, *, embed_dim):
    """x: (B, 1); params from prepare_timestep_params -> (B, embed_dim)."""
    B = x.shape[0]
    E_pad = w2t.shape[1]

    # Batch tile: >= 8 sublanes, capped at 512 rows (v7x 64 MiB-safe; on v6e the
    # cap could be raised to 1024 for very large B). For B > 512 the grid has
    # >= 2 steps, so the "parallel" axis shards across both v7x TensorCores.
    TB = min(512, _round_up(max(B, 1), 8))
    B_pad = _round_up(max(B, 1), TB)
    grid = (B_pad // TB,)

    x_f32 = x.astype(jnp.float32).reshape(B, 1)
    if B_pad != B:
        x_pad = jnp.zeros((B_pad, 1), jnp.float32).at[:B, :].set(x_f32)
    else:
        x_pad = x_f32

    # VMEM budget: single-buffered resident w2t/x/biases + double-buffered out
    # tile + elementwise working set, with 2x slack; capped at per-core capacity
    # minus headroom.
    w2_bytes = E_pad * E_pad * jnp.dtype(w2t.dtype).itemsize
    footprint = (
        w2_bytes                     # resident w2t (single-buffered)
        + 3 * E_pad * 4              # w1t, b1, b2
        + B_pad * 4                  # resident x
        + 2 * TB * E_pad * 4         # double-buffered out tile
        + 3 * TB * E_pad * 4         # h (f32) + bf16 copy + accumulator working set
    )
    vmem_bytes = min(max(2 * footprint, 4 << 20), _vmem_cap_bytes())

    def _const_map(i):
        return (0, 0)

    out = pl.pallas_call(
        functools.partial(timestep_embed_kernel, block_b=TB),
        out_shape=jax.ShapeDtypeStruct((B_pad, E_pad), jnp.float32),
        grid_spec=pltpu.PrefetchScalarGridSpec(
            num_scalar_prefetch=0,
            grid=grid,
            in_specs=[
                _resident_spec((B_pad, 1), _const_map),      # x (resident)
                _resident_spec((1, E_pad), _const_map),      # w1t
                _resident_spec((1, E_pad), _const_map),      # b1
                _resident_spec((E_pad, E_pad), _const_map),  # w2t
                _resident_spec((1, E_pad), _const_map),      # b2
            ],
            out_specs=pl.BlockSpec((TB, E_pad), lambda i: (i, 0)),
        ),
        compiler_params=pltpu.CompilerParams(
            dimension_semantics=("parallel",),
            vmem_limit_bytes=int(vmem_bytes),
        ),
    )(x_pad, w1t, b1p, w2t, b2p)

    # Avoid an extra HBM round trip when padding is a no-op (E % 128 == 0 and
    # B already a multiple of the tile).
    if B_pad == B and E_pad == embed_dim:
        return out
    return out[:B, :embed_dim]  # both bounds are static Python ints now


def _reference(x, w1, b1, w2, b2):
    h = x @ w1.T + b1
    h = h * jax.nn.sigmoid(h)
    return h @ w2.T + b2


if __name__ == "__main__":
    B = 2
    E = 32  # embed_dim

    key = jax.random.PRNGKey(0)
    kx, k1w, k1b, k2w, k2b = jax.random.split(key, 5)

    # Deterministic synthetic parameters (shapes match nn.Linear init).
    x = jax.random.normal(kx, (B, 1), dtype=jnp.float32)          # timestep per batch
    w1 = jax.random.normal(k1w, (E, 1), dtype=jnp.float32) * 0.5  # Linear(1, E).weight
    b1 = jax.random.normal(k1b, (E,), dtype=jnp.float32) * 0.1    # Linear(1, E).bias
    w2 = jax.random.normal(k2w, (E, E), dtype=jnp.float32) * 0.1  # Linear(E, E).weight
    b2 = jax.random.normal(k2b, (E,), dtype=jnp.float32) * 0.1    # Linear(E, E).bias

    # Hoisted param prep (done once at load time, not per diffusion step).
    params, embed_dim = prepare_timestep_params(w1, b1, w2, b2)

    out = timestep_embedding(x, *params, embed_dim=embed_dim)
    jax.block_until_ready(out)

    ref = _reference(x, w1, b1, w2, b2)
    assert out.shape == (B, E), out.shape
    # bf16 MXU operands (deliberate, per perf review) -> bf16-level matmul error;
    # tolerance set accordingly. Use prepare_timestep_params(mxu_dtype=jnp.float32)
    # for the strict HIGHEST-precision f32 path.
    assert jnp.allclose(out, ref, atol=1e-2, rtol=1e-2), "mismatch vs reference"

    print("KERNEL_OK")
</pallas_src>

<mosaic_0001>
module attributes {stable_mosaic.version = 11 : i64} {
  func.func @timestep_embed_kernel(%arg0: i32, %arg1: memref<8x1xf32, #tpu.memory_space<vmem>>, %arg2: memref<1x128xf32, #tpu.memory_space<vmem>>, %arg3: memref<1x128xf32, #tpu.memory_space<vmem>>, %arg4: memref<128x128xbf16, #tpu.memory_space<vmem>>, %arg5: memref<1x128xf32, #tpu.memory_space<vmem>>, %arg6: memref<8x128xf32, #tpu.memory_space<vmem>>) attributes {dimension_semantics = [#tpu.dimension_semantics<parallel>], iteration_bounds = array<i64: 1>, scalar_prefetch = 0 : i64, scratch_operands = 0 : i64, tpu.core_type = #tpu.core_type<tc>, window_params = [{pipeline_mode = #tpu.pipeline_mode<synchronous>, transform_indices = @transform_0, window_bounds = array<i64: 8, 1>}, {pipeline_mode = #tpu.pipeline_mode<synchronous>, transform_indices = @transform_1, window_bounds = array<i64: 1, 128>}, {pipeline_mode = #tpu.pipeline_mode<synchronous>, transform_indices = @transform_2, window_bounds = array<i64: 1, 128>}, {pipeline_mode = #tpu.pipeline_mode<synchronous>, transform_indices = @transform_3, window_bounds = array<i64: 128, 128>}, {pipeline_mode = #tpu.pipeline_mode<synchronous>, transform_indices = @transform_4, window_bounds = array<i64: 1, 128>}, {transform_indices = @transform_5, window_bounds = array<i64: 8, 128>}]} {
    %c8_i32 = arith.constant 8 : i32
    %0 = arith.muli %arg0, %c8_i32 : i32
    %1 = tpu.assume_multiple %0, 8 : i32
    %2 = arith.index_cast %1 : i32 to index
    %c0 = arith.constant 0 : index
    %3 = vector.load %arg1[%2, %c0] : memref<8x1xf32, #tpu.memory_space<vmem>>, vector<8x1xf32>
    %c0_0 = arith.constant 0 : index
    %c0_1 = arith.constant 0 : index
    %4 = vector.load %arg2[%c0_0, %c0_1] : memref<1x128xf32, #tpu.memory_space<vmem>>, vector<1x128xf32>
    %5 = vector.broadcast %3 : vector<8x1xf32> to vector<8x128xf32>
    %6 = vector.broadcast %4 : vector<1x128xf32> to vector<8x128xf32>
    %7 = arith.mulf %5, %6 : vector<8x128xf32>
    %c0_2 = arith.constant 0 : index
    %c0_3 = arith.constant 0 : index
    %8 = vector.load %arg3[%c0_2, %c0_3] : memref<1x128xf32, #tpu.memory_space<vmem>>, vector<1x128xf32>
    %9 = vector.broadcast %8 : vector<1x128xf32> to vector<8x128xf32>
    %10 = arith.addf %7, %9 : vector<8x128xf32>
    %11 = arith.negf %10 : vector<8x128xf32>
    %12 = math.exp %11 : vector<8x128xf32>
    %cst = arith.constant 1.000000e+00 : f32
    %13 = vector.broadcast %cst : f32 to vector<8x128xf32>
    %14 = arith.addf %13, %12 : vector<8x128xf32>
    %15 = arith.divf %13, %14 : vector<8x128xf32>
    %16 = arith.mulf %10, %15 : vector<8x128xf32>
    %c0_4 = arith.constant 0 : index
    %c0_5 = arith.constant 0 : index
    %17 = vector.load %arg4[%c0_4, %c0_5] : memref<128x128xbf16, #tpu.memory_space<vmem>>, vector<128x128xbf16>
    %18 = arith.truncf %16 : vector<8x128xf32> to vector<8x128xbf16>
    %cst_6 = arith.constant dense<0.000000e+00> : vector<8x128xf32>
    %19 = tpu.matmul %18, %17, %cst_6 {dimension_numbers = #tpu.dot_dimension_numbers<[1], [0], [0], [1], [0, 0, 1, 1], [], []>} : vector<8x128xbf16>, vector<128x128xbf16>, vector<8x128xf32> -> vector<8x128xf32>
    %c0_7 = arith.constant 0 : index
    %c0_8 = arith.constant 0 : index
    %20 = vector.load %arg5[%c0_7, %c0_8] : memref<1x128xf32, #tpu.memory_space<vmem>>, vector<1x128xf32>
    %21 = vector.broadcast %20 : vector<1x128xf32> to vector<8x128xf32>
    %22 = arith.addf %19, %21 : vector<8x128xf32>
    %c0_9 = arith.constant 0 : index
    %c0_10 = arith.constant 0 : index
    %23 = vector.load %arg6[%c0_9, %c0_10] : memref<8x128xf32, #tpu.memory_space<vmem>>, vector<8x128xf32>
    tpu.vector_store %arg6[%c0_9, %c0_10], %22 {strides = array<i32>} : memref<8x128xf32, #tpu.memory_space<vmem>>, vector<8x128xf32>,
    return
  }
  func.func @transform_0(%arg0: i32) -> (i32, i32) {
    %c0_i32 = arith.constant 0 : i32
    %c0_i32_0 = arith.constant 0 : i32
    %c0_i32_1 = arith.constant 0 : i32
    return %c0_i32, %c0_i32_0 : i32, i32
  }
  func.func @transform_1(%arg0: i32) -> (i32, i32) {
    %c0_i32 = arith.constant 0 : i32
    %c0_i32_0 = arith.constant 0 : i32
    %c0_i32_1 = arith.constant 0 : i32
    return %c0_i32, %c0_i32_0 : i32, i32
  }
  func.func @transform_2(%arg0: i32) -> (i32, i32) {
    %c0_i32 = arith.constant 0 : i32
    %c0_i32_0 = arith.constant 0 : i32
    %c0_i32_1 = arith.constant 0 : i32
    return %c0_i32, %c0_i32_0 : i32, i32
  }
  func.func @transform_3(%arg0: i32) -> (i32, i32) {
    %c0_i32 = arith.constant 0 : i32
    %c0_i32_0 = arith.constant 0 : i32
    %c0_i32_1 = arith.constant 0 : i32
    return %c0_i32, %c0_i32_0 : i32, i32
  }
  func.func @transform_4(%arg0: i32) -> (i32, i32) {
    %c0_i32 = arith.constant 0 : i32
    %c0_i32_0 = arith.constant 0 : i32
    %c0_i32_1 = arith.constant 0 : i32
    return %c0_i32, %c0_i32_0 : i32, i32
  }
  func.func @transform_5(%arg0: i32) -> (i32, i32) {
    %c0_i32 = arith.constant 0 : i32
    %c0_i32_0 = arith.constant 0 : i32
    return %arg0, %c0_i32 : i32, i32
  }
}

</mosaic_0001>

<llo_original>
// kernel: timestep_embedding.1
$region0: #{timestep_embedding.1}
  #allocation0 [shape = 'u32[]', space=smem, size = 0x4, offset = 0x4, fixed_abs, tag = 'smem constant byte address 0x4 - core index']
  #allocation1 [shape = 'u32[72,128]{1,0:T(1,128)}', space=vmem, size = 0x9000, scoped, tag = 'internal scratch']
  %s0 = inlined_call_operand.vmem [shape: f32[8,1], index: 0, kind: input, shape index: {}]
  %s1 = inlined_call_operand.vmem [shape: f32[1,128], index: 1, kind: input, shape index: {}]
  %s2 = inlined_call_operand.vmem [shape: f32[1,128], index: 2, kind: input, shape index: {}]
  %s3 = inlined_call_operand.hbm [shape: bf16[128,128], index: 3, kind: input, shape index: {}]
  %s4 = inlined_call_operand.vmem [shape: f32[1,128], index: 4, kind: input, shape index: {}]
  %s5 = inlined_call_operand.vmem [shape: f32[8,128], index: 5, kind: output, shape index: {}]
  %s6 = sld [smem:[#allocation0]]
  $region34: #{timestep_embedding.1} parent=0
    _
  %s8 = ssub.s32 1, %s6
  %s9 = scalar_select 0, %s8, %s6
  $region1: #{timestep_embedding.1} parent=0
    #allocation2 [shape = 'u8[32768]{0}', space=vmem, size = 0x8000, scoped, tag = 'input window, operand 3, single buffered']
    #allocation3 [shape = 's32[1]{0}', space=sflag, size = 0x4, scoped, tag = 'scoped memory for timestep_embedding.1']
    %10 = vsyncpa [#allocation3], 0
    // Predicated region
    $region2: #{timestep_embedding.1} parent=1 // pred_check
      _
    $region3: #{timestep_embedding.1} parent=1 // pred_check_branch
      %12 = sbr.rel (0) target = $region5
    $region4: #{timestep_embedding.1} parent=1 // pred_region
      _
    $region5: #{timestep_embedding.1} parent=1 // pred_fallthru
      _
    // Predicated region
    $region6: #{timestep_embedding.1} parent=1 // pred_check
      _
    $region7: #{timestep_embedding.1} parent=1 // pred_check_branch
      %14 = sbr.rel (0) target = $region9
    $region8: #{timestep_embedding.1} parent=1 // pred_region
      _
    $region9: #{timestep_embedding.1} parent=1 // pred_fallthru
      _
    // Predicated region
    $region10: #{timestep_embedding.1} parent=1 // pred_check
      _
    $region11: #{timestep_embedding.1} parent=1 // pred_check_branch
      %16 = sbr.rel (0) target = $region13
    $region12: #{timestep_embedding.1} parent=1 // pred_region
      _
    $region13: #{timestep_embedding.1} parent=1 // pred_fallthru
      _
    // Predicated region
    $region14: #{timestep_embedding.1} parent=1 // pred_check
      _
    $region15: #{timestep_embedding.1} parent=1 // pred_check_branch
      %18 = sbr.rel (0) target = $region17
    $region16: #{timestep_embedding.1} parent=1 // pred_region
      %20 = vsyncadd [#allocation3], 0
      %s21 = sshll.u32 %s3, 4
      %s22 = int_to_ptr.hbm [resolvable:$true] %s21
      %s23 = sshll.u32 [#allocation2], 4
      %s24 = int_to_ptr.vmem [resolvable:$true] %s23
      %29 = dma.hbm_to_vmem [thread:$0]  %s22, 1024, %s24, [#allocation3], 64, 64, 4
    $region17: #{timestep_embedding.1} parent=1 // pred_fallthru
      _
    // Predicated region
    $region18: #{timestep_embedding.1} parent=1 // pred_check
      _
    $region19: #{timestep_embedding.1} parent=1 // pred_check_branch
      %31 = sbr.rel (0) target = $region21
    $region20: #{timestep_embedding.1} parent=1 // pred_region
      _
    $region21: #{timestep_embedding.1} parent=1 // pred_fallthru
      _
    // Predicated region
    $region22: #{timestep_embedding.1} parent=1 // pred_check
      _
    $region23: #{timestep_embedding.1} parent=1 // pred_check_branch
      %33 = sbr.rel (0) target = $region25
    $region24: #{timestep_embedding.1} parent=1 // pred_region
      %35 = dma.done [#allocation3], 1024
    $region25: #{timestep_embedding.1} parent=1 // pred_fallthru
      _
    %s36 = smul.u32 0, 8
    %s37 = scalar_lea.vmem %s0, %s36
    %v38 = vld [vmem:[%s37] sm:$0xff]
    %v39 = vld [vmem:[%s1] sm:$0x1]
    %41 = vset.pattern.permute.xlu0 0
    %42 = vperm.xlu0 %41, %v38
    %v43 = vpop.permute.xlu0 %42
    %v46 = vperm.slane %v39, 0
    %v48 = vmul.f32 %v43, %v46
    %v49 = vld [vmem:[%s2] sm:$0x1]
    %v51 = vperm.slane %v49, 0
    %v53 = vadd.f32 %v48, %v51
    %v54 = vxor.u32 %v53, 2147483648
    %v55 = vmul.f32 %v54, 1.442695
    %v56 = vpow.pop %v55
    %v57 = vadd.f32 %v56, 1.0
    %v58 = vrcp.pop %v57
    %v59 = vmul.f32 %v57, %v58
    %v60 = vsub.f32 1.0, %v59
    %v61 = vmul.f32 %v58, %v60
    %v62 = vadd.f32 %v58, %v61
    %vm63 = vweird.f32 %v57
    %vm64 = vweird.f32 %v58
    %vm65 = vmor %vm63, %vm64
    %v66 = vsel %vm65, %v58, %v62
    %v67 = vand.u32 2147483647, %v57
    %vm68 = vcmp.eq.f32.partialorder %v67, 8.507059e+37
    %v69 = vand.u32 %v57, 2147483648
    %v70 = vor.u32 1.1754944e-38, %v69
    %v71 = vsel %vm68, %v70, %v66
    %v72 = vmul.f32 1.0, %v71
    %v73 = vmul.f32 %v53, %v72
    %v74 = vld [vmem:[#allocation2] sm:$0xf]
    %v75 = vld [vmem:[#allocation2 + $0x4] sm:$0xf]
    %v76 = vld [vmem:[#allocation2 + $0x8] sm:$0xf]
    %v77 = vld [vmem:[#allocation2 + $0xc] sm:$0xf]
    %v78 = vld [vmem:[#allocation2 + $0x10] sm:$0xf]
    %v79 = vld [vmem:[#allocation2 + $0x14] sm:$0xf]
    %v80 = vld [vmem:[#allocation2 + $0x18] sm:$0xf]
    %v81 = vld [vmem:[#allocation2 + $0x1c] sm:$0xf]
    %v82 = vld [vmem:[#allocation2 + $0x20] sm:$0xf]
    %v83 = vld [vmem:[#allocation2 + $0x24] sm:$0xf]
    %v84 = vld [vmem:[#allocation2 + $0x28] sm:$0xf]
    %v85 = vld [vmem:[#allocation2 + $0x2c] sm:$0xf]
    %v86 = vld [vmem:[#allocation2 + $0x30] sm:$0xf]
    %v87 = vld [vmem:[#allocation2 + $0x34] sm:$0xf]
    %v88 = vld [vmem:[#allocation2 + $0x38] sm:$0xf]
    %v89 = vld [vmem:[#allocation2 + $0x3c] sm:$0xf]
    %v90 = vpack.c.bf16 %v73, %v73
    %v91 = vld [vmem:[%s4] sm:$0x1]
    %v93 = vperm.slane %v91, 0
    %v111 = vunpack.c.l.b16 %v74
    %v112 = vunpack.c.l.b16 %v75
    %v113 = vunpack.c.l.b16 %v76
    %v114 = vunpack.c.l.b16 %v77
    %v115 = vunpack.c.l.b16 %v78
    %v116 = vunpack.c.l.b16 %v79
    %v117 = vunpack.c.l.b16 %v80
    %v118 = vunpack.c.l.b16 %v81
    %v119 = vunpack.c.l.b16 %v82
    %v120 = vunpack.c.l.b16 %v83
    %v121 = vunpack.c.l.b16 %v84
    %v122 = vunpack.c.l.b16 %v85
    %v123 = vunpack.c.l.b16 %v86
    %v124 = vunpack.c.l.b16 %v87
    %v125 = vunpack.c.l.b16 %v88
    %v126 = vunpack.c.l.b16 %v89
    %v127 = vpack.c.b16 %v112, %v111
    %v128 = vpack.c.b16 %v114, %v113
    %v129 = vpack.c.b16 %v116, %v115
    %v130 = vpack.c.b16 %v118, %v117
    %v131 = vpack.c.b16 %v120, %v119
    %v132 = vpack.c.b16 %v122, %v121
    %v133 = vpack.c.b16 %v124, %v123
    %v134 = vpack.c.b16 %v126, %v125
    %143 = vmatpush.bf16.msra.mxu0 %v134
    %144 = vmatpush.bf16.msra.mxu0 %v133
    %145 = vmatpush.bf16.msra.mxu0 %v132
    %146 = vmatpush.bf16.msra.mxu0 %v131
    %147 = vmatpush.bf16.msra.mxu0 %v130
    %148 = vmatpush.bf16.msra.mxu0 %v129
    %149 = vmatpush.bf16.msra.mxu0 %v128
    %150 = vmatpush.bf16.msra.mxu0 %v127
    %151 = vmatmul.bf16.gmra.mxu0 %v90
    %v152 = vpop.f32.mrf.mxu0
    %v153 = vadd.f32 %v93, %v152
    %v154 = vpop.f32.mrf.mxu0
    %155 = vdwg.mxu0
    %156 = vst [vmem:[%s5] sm:$0xff] %v153
    // Predicated region
    $region26: #{timestep_embedding.1} parent=1 // pred_check
      _
    $region27: #{timestep_embedding.1} parent=1 // pred_check_branch
      %158 = sbr.rel (0) target = $region29
    $region28: #{timestep_embedding.1} parent=1 // pred_region
      _
    $region29: #{timestep_embedding.1} parent=1 // pred_fallthru
      _
    // Predicated region
    $region30: #{timestep_embedding.1} parent=1 // pred_check
      _
    $region31: #{timestep_embedding.1} parent=1 // pred_check_branch
      %160 = sbr.rel (0) target = $region33
    $region32: #{timestep_embedding.1} parent=1 // pred_region
      _
    $region33: #{timestep_embedding.1} parent=1 // pred_fallthru
      _
    %161 = vsyncpa [#allocation3], 1

</llo_original>
